<compile_context>
chip_gen: v7x
topology: tpu7x:2x2x1
jax: 0.10.0
libtpu: 0.0.40
codegen_flags: <defaults>
</compile_context>

<pallas_src>
import jax
import jax.numpy as jnp
from jax.experimental import pallas as pl
from jax.experimental.pallas import tpu as pltpu


def _round_up(x, m):
    return (x + m - 1) // m * m


def _gcn1gc_kernel(a_ref, h_ref, w1_ref, b1_ref, wc1_ref, bc1_ref,
                   wc3_ref, bc3_ref, out_ref):
    tb, n_nodes, in_dim = h_ref.shape
    hidden_p = w1_ref.shape[1]

    a = a_ref[...]                      # [tb, N, N]  normalized adjacency
    h = h_ref[...]                      # [tb, N, in_dim]

    # --- GraphConv: transform-then-aggregate ((A H) W == A (H W)) ---
    # One big MXU matmul over all tb*N node rows of the block.
    hw = jnp.dot(h.reshape(tb * n_nodes, in_dim), w1_ref[...],
                 preferred_element_type=jnp.float32)
    hw = hw.reshape(tb, n_nodes, hidden_p)
    # Per-graph aggregation (batched matmul), then bias + relu.
    ah = jnp.einsum('bnm,bmf->bnf', a, hw,
                    preferred_element_type=jnp.float32)
    h1 = jnp.maximum(ah + b1_ref[...], 0.0)          # [tb, N, hidden_p]

    # --- mean_nodes readout for the whole block ---
    hg = jnp.mean(h1, axis=1)                        # [tb, hidden_p]

    # --- 2-layer head, batched over the block ---
    o = jnp.maximum(
        jnp.dot(hg, wc1_ref[...], preferred_element_type=jnp.float32)
        + bc1_ref[...], 0.0)
    out = jnp.dot(o, wc3_ref[...], preferred_element_type=jnp.float32) \
        + bc3_ref[...]

    out_ref[...] = out                               # [tb, out_p] lane-dense


def gcn_reg_1gc_forward(a_norm, h, params, *, block_b=8):
    """a_norm: [B, N, N] f32, h: [B, N, in_dim] f32 -> [B, n_classes] f32."""
    B, N, in_dim = h.shape
    hidden = params["w1"].shape[1]
    n_classes = params["wc3"].shape[1]

    # Pad hidden / class dims to full lane width (128). Padded channels stay
    # exact zeros through relu/mean/matmul, so slicing at the end is exact.
    hidden_p = _round_up(hidden, 128)
    out_p = _round_up(n_classes, 128)

    def padc(x, rows, cols):
        return jnp.pad(x, ((0, rows - x.shape[0]), (0, cols - x.shape[1])))

    w1 = padc(params["w1"], in_dim, hidden_p)
    b1 = padc(params["b1"], 1, hidden_p)
    wc1 = padc(params["wc1"], hidden_p, hidden_p)
    bc1 = padc(params["bc1"], 1, hidden_p)
    wc3 = padc(params["wc3"], hidden_p, out_p)
    bc3 = padc(params["bc3"], 1, out_p)

    # Block the batch axis so many graphs share one grid step.
    tb = min(block_b, B)
    B_pad = _round_up(B, tb)
    if B_pad != B:
        a_norm = jnp.pad(a_norm, ((0, B_pad - B), (0, 0), (0, 0)))
        h = jnp.pad(h, ((0, B_pad - B), (0, 0), (0, 0)))

    grid = (B_pad // tb,)
    full2d = lambda arr: pl.BlockSpec(arr.shape, lambda b: (0, 0))

    in_specs = [
        pl.BlockSpec((tb, N, N), lambda b: (b, 0, 0)),       # adjacency block
        pl.BlockSpec((tb, N, in_dim), lambda b: (b, 0, 0)),  # node features
        full2d(w1), full2d(b1),
        full2d(wc1), full2d(bc1),
        full2d(wc3), full2d(bc3),
    ]
    out_spec = pl.BlockSpec((tb, out_p), lambda b: (b, 0))

    out = pl.pallas_call(
        _gcn1gc_kernel,
        out_shape=jax.ShapeDtypeStruct((B_pad, out_p), jnp.float32),
        grid=grid,
        in_specs=in_specs,
        out_specs=out_spec,
        compiler_params=pltpu.CompilerParams(
            dimension_semantics=("parallel",)),   # batch blocks are independent
    )(a_norm, h, w1, b1, wc1, bc1, wc3, bc3)

    return out[:B, :n_classes]


def _reference(a_norm, h, p):
    def one(a, x):
        h1 = jnp.maximum(a @ x @ p["w1"] + p["b1"], 0.0)
        hg = jnp.mean(h1, axis=0, keepdims=True)
        o = jnp.maximum(hg @ p["wc1"] + p["bc1"], 0.0)
        return (o @ p["wc3"] + p["bc3"])[0]
    return jax.vmap(one)(a_norm, h)


def make_params(key, in_dim, hidden, n_classes):
    ks = jax.random.split(key, 6)

    def lin(kw, fan_in, fan_out):
        lim = 1.0 / jnp.sqrt(fan_in)
        return jax.random.uniform(kw, (fan_in, fan_out), jnp.float32, -lim, lim)

    return {
        "w1": lin(ks[0], in_dim, hidden),
        "b1": jnp.zeros((1, hidden), jnp.float32),
        "wc1": lin(ks[1], hidden, hidden),
        "bc1": 0.01 * jnp.ones((1, hidden), jnp.float32),
        "wc3": lin(ks[2], hidden, n_classes),
        "bc3": jnp.zeros((1, n_classes), jnp.float32),
    }


def make_graph_batch(key, B, N, in_dim):
    """Random symmetric adjacency (no self loops), symmetric normalization."""
    k_a, k_h = jax.random.split(key)
    upper = (jax.random.uniform(k_a, (B, N, N)) > 0.5).astype(jnp.float32)
    upper = jnp.triu(upper, k=1)
    adj = upper + jnp.transpose(upper, (0, 2, 1))            # symmetric, 0 diag
    deg = jnp.clip(jnp.sum(adj, axis=-1), 1.0, None)         # clamp(min=1)
    d_inv_sqrt = 1.0 / jnp.sqrt(deg)
    a_norm = adj * d_inv_sqrt[:, :, None] * d_inv_sqrt[:, None, :]
    hfeat = jax.random.normal(k_h, (B, N, in_dim), jnp.float32)
    return a_norm.astype(jnp.float32), hfeat


if __name__ == "__main__":
    B, N = 2, 8                    # 2 graphs, 8 nodes each
    in_dim, hidden, n_classes = 16, 32, 1

    key = jax.random.PRNGKey(0)
    k_params, k_graph = jax.random.split(key)
    params = make_params(k_params, in_dim, hidden, n_classes)
    a_norm, h = make_graph_batch(k_graph, B, N, in_dim)

    out = gcn_reg_1gc_forward(a_norm, h, params)
    out = jax.block_until_ready(out)

    ref = _reference(a_norm, h, params)
    assert out.shape == (B, n_classes), out.shape
    assert jnp.allclose(out, ref, atol=1e-4, rtol=1e-4), (out, ref)

    print("KERNEL_OK")
</pallas_src>

<mosaic_0001>
module attributes {stable_mosaic.version = 11 : i64} {
  func.func @_gcn1gc_kernel(%arg0: i32, %arg1: memref<2x8x8xf32, #tpu.memory_space<vmem>>, %arg2: memref<2x8x16xf32, #tpu.memory_space<vmem>>, %arg3: memref<16x128xf32, #tpu.memory_space<vmem>>, %arg4: memref<1x128xf32, #tpu.memory_space<vmem>>, %arg5: memref<128x128xf32, #tpu.memory_space<vmem>>, %arg6: memref<1x128xf32, #tpu.memory_space<vmem>>, %arg7: memref<128x128xf32, #tpu.memory_space<vmem>>, %arg8: memref<1x128xf32, #tpu.memory_space<vmem>>, %arg9: memref<2x128xf32, #tpu.memory_space<vmem>>) attributes {dimension_semantics = [#tpu.dimension_semantics<parallel>], iteration_bounds = array<i64: 1>, scalar_prefetch = 0 : i64, scratch_operands = 0 : i64, tpu.core_type = #tpu.core_type<tc>, window_params = [{transform_indices = @transform_0, window_bounds = array<i64: 2, 8, 8>}, {transform_indices = @transform_1, window_bounds = array<i64: 2, 8, 16>}, {pipeline_mode = #tpu.pipeline_mode<synchronous>, transform_indices = @transform_2, window_bounds = array<i64: 16, 128>}, {pipeline_mode = #tpu.pipeline_mode<synchronous>, transform_indices = @transform_3, window_bounds = array<i64: 1, 128>}, {pipeline_mode = #tpu.pipeline_mode<synchronous>, transform_indices = @transform_4, window_bounds = array<i64: 128, 128>}, {pipeline_mode = #tpu.pipeline_mode<synchronous>, transform_indices = @transform_5, window_bounds = array<i64: 1, 128>}, {pipeline_mode = #tpu.pipeline_mode<synchronous>, transform_indices = @transform_6, window_bounds = array<i64: 128, 128>}, {pipeline_mode = #tpu.pipeline_mode<synchronous>, transform_indices = @transform_7, window_bounds = array<i64: 1, 128>}, {transform_indices = @transform_8, window_bounds = array<i64: 2, 128>}]} {
    %c0 = arith.constant 0 : index
    %c0_0 = arith.constant 0 : index
    %c0_1 = arith.constant 0 : index
    %0 = vector.load %arg1[%c0, %c0_0, %c0_1] : memref<2x8x8xf32, #tpu.memory_space<vmem>>, vector<2x8x8xf32>
    %c0_2 = arith.constant 0 : index
    %c0_3 = arith.constant 0 : index
    %c0_4 = arith.constant 0 : index
    %1 = vector.load %arg2[%c0_2, %c0_3, %c0_4] : memref<2x8x16xf32, #tpu.memory_space<vmem>>, vector<2x8x16xf32>
    %2 = vector.shape_cast %1 : vector<2x8x16xf32> to vector<16x16xf32>
    %c0_5 = arith.constant 0 : index
    %c0_6 = arith.constant 0 : index
    %3 = vector.load %arg3[%c0_5, %c0_6] : memref<16x128xf32, #tpu.memory_space<vmem>>, vector<16x128xf32>
    %cst = arith.constant dense<0.000000e+00> : vector<16x128xf32>
    %4 = tpu.matmul %2, %3, %cst {dimension_numbers = #tpu.dot_dimension_numbers<[1], [0], [0], [1], [0, 0, 1, 1], [], []>} : vector<16x16xf32>, vector<16x128xf32>, vector<16x128xf32> -> vector<16x128xf32>
    %5 = vector.shape_cast %4 : vector<16x128xf32> to vector<2x8x128xf32>
    "tpu.trace_start"() <{level = 10 : i32, message = "bnm,bmf->bnf"}> : () -> ()
    %cst_7 = arith.constant dense<0.000000e+00> : vector<2x8x128xf32>
    %6 = tpu.matmul %0, %5, %cst_7 {dimension_numbers = #tpu.dot_dimension_numbers<[2], [1], [1], [2], [0, 0, 0, 1, 1, 2], [0], [0]>} : vector<2x8x8xf32>, vector<2x8x128xf32>, vector<2x8x128xf32> -> vector<2x8x128xf32>
    "tpu.trace_stop"() : () -> ()
    %c0_8 = arith.constant 0 : index
    %c0_9 = arith.constant 0 : index
    %7 = vector.load %arg4[%c0_8, %c0_9] : memref<1x128xf32, #tpu.memory_space<vmem>>, vector<1x128xf32>
    %8 = vector.shape_cast %7 : vector<1x128xf32> to vector<1x1x128xf32>
    %9 = vector.broadcast %8 : vector<1x1x128xf32> to vector<2x8x128xf32>
    %10 = arith.addf %6, %9 : vector<2x8x128xf32>
    %cst_10 = arith.constant 0.000000e+00 : f32
    %11 = vector.broadcast %cst_10 : f32 to vector<2x8x128xf32>
    %12 = arith.maximumf %10, %11 : vector<2x8x128xf32>
    %cst_11 = arith.constant dense<0.000000e+00> : vector<2x128xf32>
    %13 = vector.multi_reduction <add>, %12, %cst_11 [1] : vector<2x8x128xf32> to vector<2x128xf32>
    %cst_12 = arith.constant 8.000000e+00 : f32
    %14 = vector.broadcast %cst_12 : f32 to vector<2x128xf32>
    %15 = arith.divf %13, %14 : vector<2x128xf32>
    %c0_13 = arith.constant 0 : index
    %c0_14 = arith.constant 0 : index
    %16 = vector.load %arg5[%c0_13, %c0_14] : memref<128x128xf32, #tpu.memory_space<vmem>>, vector<128x128xf32>
    %cst_15 = arith.constant dense<0.000000e+00> : vector<2x128xf32>
    %17 = tpu.matmul %15, %16, %cst_15 {dimension_numbers = #tpu.dot_dimension_numbers<[1], [0], [0], [1], [0, 0, 1, 1], [], []>} : vector<2x128xf32>, vector<128x128xf32>, vector<2x128xf32> -> vector<2x128xf32>
    %c0_16 = arith.constant 0 : index
    %c0_17 = arith.constant 0 : index
    %18 = vector.load %arg6[%c0_16, %c0_17] : memref<1x128xf32, #tpu.memory_space<vmem>>, vector<1x128xf32>
    %19 = vector.broadcast %18 : vector<1x128xf32> to vector<2x128xf32>
    %20 = arith.addf %17, %19 : vector<2x128xf32>
    %cst_18 = arith.constant 0.000000e+00 : f32
    %21 = vector.broadcast %cst_18 : f32 to vector<2x128xf32>
    %22 = arith.maximumf %20, %21 : vector<2x128xf32>
    %c0_19 = arith.constant 0 : index
    %c0_20 = arith.constant 0 : index
    %23 = vector.load %arg7[%c0_19, %c0_20] : memref<128x128xf32, #tpu.memory_space<vmem>>, vector<128x128xf32>
    %cst_21 = arith.constant dense<0.000000e+00> : vector<2x128xf32>
    %24 = tpu.matmul %22, %23, %cst_21 {dimension_numbers = #tpu.dot_dimension_numbers<[1], [0], [0], [1], [0, 0, 1, 1], [], []>} : vector<2x128xf32>, vector<128x128xf32>, vector<2x128xf32> -> vector<2x128xf32>
    %c0_22 = arith.constant 0 : index
    %c0_23 = arith.constant 0 : index
    %25 = vector.load %arg8[%c0_22, %c0_23] : memref<1x128xf32, #tpu.memory_space<vmem>>, vector<1x128xf32>
    %26 = vector.broadcast %25 : vector<1x128xf32> to vector<2x128xf32>
    %27 = arith.addf %24, %26 : vector<2x128xf32>
    %c0_24 = arith.constant 0 : index
    %c0_25 = arith.constant 0 : index
    %28 = vector.load %arg9[%c0_24, %c0_25] : memref<2x128xf32, #tpu.memory_space<vmem>>, vector<2x128xf32>
    tpu.vector_store %arg9[%c0_24, %c0_25], %27 {strides = array<i32>} : memref<2x128xf32, #tpu.memory_space<vmem>>, vector<2x128xf32>,
    return
  }
  func.func @transform_0(%arg0: i32) -> (i32, i32, i32) {
    %c0_i32 = arith.constant 0 : i32
    %c0_i32_0 = arith.constant 0 : i32
    %c0_i32_1 = arith.constant 0 : i32
    return %arg0, %c0_i32, %c0_i32_0 : i32, i32, i32
  }
  func.func @transform_1(%arg0: i32) -> (i32, i32, i32) {
    %c0_i32 = arith.constant 0 : i32
    %c0_i32_0 = arith.constant 0 : i32
    %c0_i32_1 = arith.constant 0 : i32
    return %arg0, %c0_i32, %c0_i32_0 : i32, i32, i32
  }
  func.func @transform_2(%arg0: i32) -> (i32, i32) {
    %c0_i32 = arith.constant 0 : i32
    %c0_i32_0 = arith.constant 0 : i32
    %c0_i32_1 = arith.constant 0 : i32
    return %c0_i32, %c0_i32_0 : i32, i32
  }
  func.func @transform_3(%arg0: i32) -> (i32, i32) {
    %c0_i32 = arith.constant 0 : i32
    %c0_i32_0 = arith.constant 0 : i32
    %c0_i32_1 = arith.constant 0 : i32
    return %c0_i32, %c0_i32_0 : i32, i32
  }
  func.func @transform_4(%arg0: i32) -> (i32, i32) {
    %c0_i32 = arith.constant 0 : i32
    %c0_i32_0 = arith.constant 0 : i32
    %c0_i32_1 = arith.constant 0 : i32
    return %c0_i32, %c0_i32_0 : i32, i32
  }
  func.func @transform_5(%arg0: i32) -> (i32, i32) {
    %c0_i32 = arith.constant 0 : i32
    %c0_i32_0 = arith.constant 0 : i32
    %c0_i32_1 = arith.constant 0 : i32
    return %c0_i32, %c0_i32_0 : i32, i32
  }
  func.func @transform_6(%arg0: i32) -> (i32, i32) {
    %c0_i32 = arith.constant 0 : i32
    %c0_i32_0 = arith.constant 0 : i32
    %c0_i32_1 = arith.constant 0 : i32
    return %c0_i32, %c0_i32_0 : i32, i32
  }
  func.func @transform_7(%arg0: i32) -> (i32, i32) {
    %c0_i32 = arith.constant 0 : i32
    %c0_i32_0 = arith.constant 0 : i32
    %c0_i32_1 = arith.constant 0 : i32
    return %c0_i32, %c0_i32_0 : i32, i32
  }
  func.func @transform_8(%arg0: i32) -> (i32, i32) {
    %c0_i32 = arith.constant 0 : i32
    %c0_i32_0 = arith.constant 0 : i32
    return %arg0, %c0_i32 : i32, i32
  }
}

</mosaic_0001>

<llo_original>
// kernel: tpu_custom_call.1
$region0: #{tpu_custom_call.1}
  #allocation0 [shape = 'u32[]', space=smem, size = 0x4, offset = 0x4, fixed_abs, tag = 'smem constant byte address 0x4 - core index']
  #allocation1 [shape = 'u32[144,128]{1,0:T(1,128)}', space=vmem, size = 0x12000, scoped, tag = 'internal scratch']
  %s0 = inlined_call_operand.hbm [shape: f32[2,8,8], index: 0, kind: input, shape index: {}]
  %s1 = inlined_call_operand.hbm [shape: f32[2,8,16], index: 1, kind: input, shape index: {}]
  %s2 = inlined_call_operand.hbm [shape: f32[16,128], index: 2, kind: input, shape index: {}]
  %s3 = inlined_call_operand.vmem [shape: f32[1,128], index: 3, kind: input, shape index: {}]
  %s4 = inlined_call_operand.hbm [shape: f32[128,128], index: 4, kind: input, shape index: {}]
  %s5 = inlined_call_operand.vmem [shape: f32[1,128], index: 5, kind: input, shape index: {}]
  %s6 = inlined_call_operand.hbm [shape: f32[128,128], index: 6, kind: input, shape index: {}]
  %s7 = inlined_call_operand.vmem [shape: f32[1,128], index: 7, kind: input, shape index: {}]
  %s8 = inlined_call_operand.hbm [shape: f32[2,128], index: 8, kind: output, shape index: {}]
  %s9 = sld [smem:[#allocation0]]
  $region62: #{tpu_custom_call.1} parent=0
    _
  %s11 = ssub.s32 1, %s9
  %s12 = scalar_select 0, %s11, %s9
  $region1: #{tpu_custom_call.1} parent=0
    #allocation2 [shape = 'u8[8192]{0}', space=vmem, size = 0x2000, scoped, tag = 'input window, operand 0, single buffered']
    #allocation3 [shape = 's32[1]{0}', space=sflag, size = 0x4, scoped, tag = 'scoped memory for tpu_custom_call.1']
    #allocation4 [shape = 's32[1]{0}', space=sflag, size = 0x4, scoped, tag = 'scoped memory for tpu_custom_call.1']
    #allocation5 [shape = 'u8[8192]{0}', space=vmem, size = 0x2000, scoped, tag = 'input window, operand 1, single buffered']
    #allocation6 [shape = 's32[1]{0}', space=sflag, size = 0x4, scoped, tag = 'scoped memory for tpu_custom_call.1']
    #allocation7 [shape = 'u8[8192]{0}', space=vmem, size = 0x2000, scoped, tag = 'input window, operand 2, single buffered']
    #allocation8 [shape = 'u8[65536]{0}', space=vmem, size = 0x10000, scoped, tag = 'input window, operand 4, single buffered']
    #allocation9 [shape = 's32[1]{0}', space=sflag, size = 0x4, scoped, tag = 'scoped memory for tpu_custom_call.1']
    #allocation10 [shape = 'u8[65536]{0}', space=vmem, size = 0x10000, scoped, tag = 'input window, operand 6, single buffered']
    #allocation11 [shape = 'u8[1024]{0}', space=vmem, size = 0x400, scoped, tag = 'output window, operand 0, single buffered']
    %13 = vsyncpa [#allocation3], 0
    %14 = vsyncpa [#allocation6], 0
    %15 = vsyncpa [#allocation9], 0
    %16 = vsyncpa [#allocation4], 0
    // Predicated region
    $region2: #{tpu_custom_call.1} parent=1 // pred_check
      _
    $region3: #{tpu_custom_call.1} parent=1 // pred_check_branch
      %18 = sbr.rel (0) target = $region5
    $region4: #{tpu_custom_call.1} parent=1 // pred_region
      %s20 = ssub.s32 256, 256
      %21 = vsyncadd [#allocation3], %s20
      %s22 = sshll.u32 [#allocation2], 4
      %s23 = int_to_ptr.vmem [resolvable:$true] %s22
      %28 = dma.hbm_to_vmem [thread:$0]  %s0, 256, %s23, [#allocation3], 128, 128, 8
    $region5: #{tpu_custom_call.1} parent=1 // pred_fallthru
      _
    // Predicated region
    $region6: #{tpu_custom_call.1} parent=1 // pred_check
      _
    $region7: #{tpu_custom_call.1} parent=1 // pred_check_branch
      %30 = sbr.rel (0) target = $region9
    $region8: #{tpu_custom_call.1} parent=1 // pred_region
      %s32 = ssub.s32 256, 256
      %33 = vsyncadd [#allocation6], %s32
      %s34 = sshll.u32 [#allocation5], 4
      %s35 = int_to_ptr.vmem [resolvable:$true] %s34
      %40 = dma.hbm_to_vmem [thread:$0]  %s1, 256, %s35, [#allocation6], 128, 128, 8
    $region9: #{tpu_custom_call.1} parent=1 // pred_fallthru
      _
    // Predicated region
    $region10: #{tpu_custom_call.1} parent=1 // pred_check
      _
    $region11: #{tpu_custom_call.1} parent=1 // pred_check_branch
      %42 = sbr.rel (0) target = $region13
    $region12: #{tpu_custom_call.1} parent=1 // pred_region
      %s44 = ssub.s32 256, 256
      %45 = vsyncadd [#allocation6], %s44
      %s46 = sshll.u32 [#allocation7], 4
      %s47 = int_to_ptr.vmem [resolvable:$true] %s46
      %52 = dma.hbm_to_vmem [thread:$0]  %s2, 256, %s47, [#allocation6], 128, 128, 8
    $region13: #{tpu_custom_call.1} parent=1 // pred_fallthru
      _
    // Predicated region
    $region14: #{tpu_custom_call.1} parent=1 // pred_check
      _
    $region15: #{tpu_custom_call.1} parent=1 // pred_check_branch
      %54 = sbr.rel (0) target = $region17
    $region16: #{tpu_custom_call.1} parent=1 // pred_region
      _
    $region17: #{tpu_custom_call.1} parent=1 // pred_fallthru
      _
    // Predicated region
    $region18: #{tpu_custom_call.1} parent=1 // pred_check
      _
    $region19: #{tpu_custom_call.1} parent=1 // pred_check_branch
      %56 = sbr.rel (0) target = $region21
    $region20: #{tpu_custom_call.1} parent=1 // pred_region
      %s58 = ssub.s32 2048, 2048
      %59 = vsyncadd [#allocation9], %s58
      %s60 = sshll.u32 [#allocation8], 4
      %s61 = int_to_ptr.vmem [resolvable:$true] %s60
      %66 = dma.hbm_to_vmem [thread:$0]  %s4, 2048, %s61, [#allocation9], 128, 128, 8
    $region21: #{tpu_custom_call.1} parent=1 // pred_fallthru
      _
    // Predicated region
    $region22: #{tpu_custom_call.1} parent=1 // pred_check
      _
    $region23: #{tpu_custom_call.1} parent=1 // pred_check_branch
      %68 = sbr.rel (0) target = $region25
    $region24: #{tpu_custom_call.1} parent=1 // pred_region
      _
    $region25: #{tpu_custom_call.1} parent=1 // pred_fallthru
      _
    // Predicated region
    $region26: #{tpu_custom_call.1} parent=1 // pred_check
      _
    $region27: #{tpu_custom_call.1} parent=1 // pred_check_branch
      %70 = sbr.rel (0) target = $region29
    $region28: #{tpu_custom_call.1} parent=1 // pred_region
      %s72 = ssub.s32 2048, 2048
      %73 = vsyncadd [#allocation9], %s72
      %s74 = sshll.u32 [#allocation10], 4
      %s75 = int_to_ptr.vmem [resolvable:$true] %s74
      %80 = dma.hbm_to_vmem [thread:$0]  %s6, 2048, %s75, [#allocation9], 128, 128, 8
    $region29: #{tpu_custom_call.1} parent=1 // pred_fallthru
      _
    // Predicated region
    $region30: #{tpu_custom_call.1} parent=1 // pred_check
      _
    $region31: #{tpu_custom_call.1} parent=1 // pred_check_branch
      %82 = sbr.rel (0) target = $region33
    $region32: #{tpu_custom_call.1} parent=1 // pred_region
      _
    $region33: #{tpu_custom_call.1} parent=1 // pred_fallthru
      _
    // Predicated region
    $region34: #{tpu_custom_call.1} parent=1 // pred_check
      _
    $region35: #{tpu_custom_call.1} parent=1 // pred_check_branch
      %84 = sbr.rel (0) target = $region37
    $region36: #{tpu_custom_call.1} parent=1 // pred_region
      %85 = dma.done [#allocation3], 256
    $region37: #{tpu_custom_call.1} parent=1 // pred_fallthru
      _
    // Predicated region
    $region38: #{tpu_custom_call.1} parent=1 // pred_check
      _
    $region39: #{tpu_custom_call.1} parent=1 // pred_check_branch
      %87 = sbr.rel (0) target = $region41
    $region40: #{tpu_custom_call.1} parent=1 // pred_region
      %88 = dma.done [#allocation6], 256
    $region41: #{tpu_custom_call.1} parent=1 // pred_fallthru
      _
    // Predicated region
    $region42: #{tpu_custom_call.1} parent=1 // pred_check
      _
    $region43: #{tpu_custom_call.1} parent=1 // pred_check_branch
      %90 = sbr.rel (0) target = $region45
    $region44: #{tpu_custom_call.1} parent=1 // pred_region
      %91 = dma.done [#allocation6], 256
    $region45: #{tpu_custom_call.1} parent=1 // pred_fallthru
      _
    // Predicated region
    $region46: #{tpu_custom_call.1} parent=1 // pred_check
      _
    $region47: #{tpu_custom_call.1} parent=1 // pred_check_branch
      %93 = sbr.rel (0) target = $region49
    $region48: #{tpu_custom_call.1} parent=1 // pred_region
      %94 = dma.done [#allocation9], 2048
    $region49: #{tpu_custom_call.1} parent=1 // pred_fallthru
      _
    // Predicated region
    $region50: #{tpu_custom_call.1} parent=1 // pred_check
      _
    $region51: #{tpu_custom_call.1} parent=1 // pred_check_branch
      %96 = sbr.rel (0) target = $region53
    $region52: #{tpu_custom_call.1} parent=1 // pred_region
      %97 = dma.done [#allocation9], 2048
    $region53: #{tpu_custom_call.1} parent=1 // pred_fallthru
      _
    %v98 = vld [vmem:[#allocation2] sm:$0xff]
    %v99 = vld [vmem:[#allocation2 + $0x8] sm:$0xff]
    %v100 = vld [vmem:[#allocation5] sm:$0xff]
    %v101 = vld [vmem:[#allocation5 + $0x8] sm:$0xff]
    %v102 = vld [vmem:[#allocation7] sm:$0xff]
    %v103 = vld [vmem:[#allocation7 + $0x8] sm:$0xff]
    %vm104 = vcmask 130048
    %v106 = vsel %vm104, %v100, 0
    %v109 = vsel %vm104, %v101, 0
    %111 = vmatprep.subr.mxu0 0.0
    %112 = vmatpush1.msra.mxu0 %v102
    %113 = vmatprep.subr.mxu0 0.0
    %114 = vmatpush1.msra.mxu0 %v103
    %115 = vmatprep.subr.mxu0 0.0
    %116 = vmatpush1.msra.mxu0 0.0
    %117 = vmatprep.subr.mxu0 0.0
    %118 = vmatpush1.msra.mxu0 0.0
    %119 = vmatprep.subr.mxu0 0.0
    %120 = vmatpush1.msra.mxu0 0.0
    %121 = vmatprep.subr.mxu0 0.0
    %122 = vmatpush1.msra.mxu0 0.0
    %123 = vmatprep.subr.mxu0 0.0
    %124 = vmatpush1.msra.mxu0 0.0
    %125 = vmatprep.subr.mxu0 0.0
    %126 = vmatpush1.msra.mxu0 0.0
    %127 = vmatprep.subr.mxu0 0.0
    %128 = vmatpush1.msra.mxu0 0.0
    %129 = vmatprep.subr.mxu0 0.0
    %130 = vmatpush1.msra.mxu0 0.0
    %131 = vmatprep.subr.mxu0 0.0
    %132 = vmatpush1.msra.mxu0 0.0
    %133 = vmatprep.subr.mxu0 0.0
    %134 = vmatpush1.msra.mxu0 0.0
    %135 = vmatprep.subr.mxu0 0.0
    %136 = vmatpush1.msra.mxu0 0.0
    %137 = vmatprep.subr.mxu0 0.0
    %138 = vmatpush1.msra.mxu0 0.0
    %139 = vmatprep.subr.mxu0 0.0
    %140 = vmatpush1.msra.mxu0 0.0
    %141 = vmatprep.subr.mxu0 0.0
    %142 = vmatpush1.msra.mxu0 0.0
    %143 = vmatprep.subr.mxu0 0.0
    %144 = vmatpush1.msra.mxu0 0.0
    %145 = vmatprep.subr.mxu0 0.0
    %146 = vmatpush1.msra.mxu0 0.0
    %147 = vmatprep.subr.mxu0 0.0
    %148 = vmatpush1.msra.mxu0 0.0
    %149 = vmatprep.subr.mxu0 0.0
    %150 = vmatpush1.msra.mxu0 0.0
    %151 = vmatprep.subr.mxu0 0.0
    %152 = vmatpush1.msra.mxu0 0.0
    %153 = vmatprep.subr.mxu0 0.0
    %154 = vmatpush1.msra.mxu0 0.0
    %155 = vmatprep.subr.mxu0 0.0
    %156 = vmatpush1.msra.mxu0 0.0
    %157 = vmatprep.subr.mxu0 0.0
    %158 = vmatpush1.msra.mxu0 0.0
    %159 = vmatprep.subr.mxu0 0.0
    %160 = vmatpush1.msra.mxu0 0.0
    %161 = vmatprep.subr.mxu0 0.0
    %162 = vmatpush1.msra.mxu0 0.0
    %163 = vmatprep.subr.mxu0 0.0
    %164 = vmatpush1.msra.mxu0 0.0
    %165 = vmatprep.subr.mxu0 0.0
    %166 = vmatpush1.msra.mxu0 0.0
    %167 = vmatprep.subr.mxu0 0.0
    %168 = vmatpush1.msra.mxu0 0.0
    %169 = vmatprep.subr.mxu0 0.0
    %170 = vmatpush1.msra.mxu0 0.0
    %171 = vmatprep.subr.mxu0 0.0
    %172 = vmatpush1.msra.mxu0 0.0
    %173 = vmatprep.subr.mxu0 0.0
    %174 = vmatpush1.msra.mxu0 0.0
    %175 = vmatprep.mubr.f32.mxu0 0.0
    %176 = vmatmul.mubr.f32.gmra.mrb[0].mxu0 %v106
    %v177 = vpop.f32.mrb[0].mxu0
    %v178 = vadd.f32 0.0, %v177
    %v179 = vpop.f32.mrb[0].mxu0
    %180 = vmatprep.mubr.f32.mxu0 0.0
    %181 = vmatmul.mubr.f32.gmra.mrb[0].mxu0 %v109
    %v182 = vpop.f32.mrb[0].mxu0
    %v183 = vadd.f32 0.0, %v182
    %v184 = vpop.f32.mrb[0].mxu0
    %185 = vdwg.mxu0
    %v186 = vld [vmem:[%s3] sm:$0x1]
    %v188 = vlaneseq
    %v189 = vshrl.u32 %v188, 7
    %v190 = vsub.s32 0, %v189
    %v191 = vrot.slane %v186, %v190
    %vm193 = vcmask 64512
    %v195 = vsel %vm193, %v98, 0
    %197 = vmatprep.subr.mxu0 0.0
    %198 = vmatpush1.msra.mxu0 %v178
    %199 = vmatprep.subr.mxu0 0.0
    %200 = vmatpush1.msra.mxu0 0.0
    %201 = vmatprep.subr.mxu0 0.0
    %202 = vmatpush1.msra.mxu0 0.0
    %203 = vmatprep.subr.mxu0 0.0
    %204 = vmatpush1.msra.mxu0 0.0
    %205 = vmatprep.subr.mxu0 0.0
    %206 = vmatpush1.msra.mxu0 0.0
    %207 = vmatprep.subr.mxu0 0.0
    %208 = vmatpush1.msra.mxu0 0.0
    %209 = vmatprep.subr.mxu0 0.0
    %210 = vmatpush1.msra.mxu0 0.0
    %211 = vmatprep.subr.mxu0 0.0
    %212 = vmatpush1.msra.mxu0 0.0
    %213 = vmatprep.subr.mxu0 0.0
    %214 = vmatpush1.msra.mxu0 0.0
    %215 = vmatprep.subr.mxu0 0.0
    %216 = vmatpush1.msra.mxu0 0.0
    %217 = vmatprep.subr.mxu0 0.0
    %218 = vmatpush1.msra.mxu0 0.0
    %219 = vmatprep.subr.mxu0 0.0
    %220 = vmatpush1.msra.mxu0 0.0
    %221 = vmatprep.subr.mxu0 0.0
    %222 = vmatpush1.msra.mxu0 0.0
    %223 = vmatprep.subr.mxu0 0.0
    %224 = vmatpush1.msra.mxu0 0.0
    %225 = vmatprep.subr.mxu0 0.0
    %226 = vmatpush1.msra.mxu0 0.0
    %227 = vmatprep.subr.mxu0 0.0
    %228 = vmatpush1.msra.mxu0 0.0
    %229 = vmatprep.subr.mxu0 0.0
    %230 = vmatpush1.msra.mxu0 0.0
    %231 = vmatprep.subr.mxu0 0.0
    %232 = vmatpush1.msra.mxu0 0.0
    %233 = vmatprep.subr.mxu0 0.0
    %234 = vmatpush1.msra.mxu0 0.0
    %235 = vmatprep.subr.mxu0 0.0
    %236 = vmatpush1.msra.mxu0 0.0
    %237 = vmatprep.subr.mxu0 0.0
    %238 = vmatpush1.msra.mxu0 0.0
    %239 = vmatprep.subr.mxu0 0.0
    %240 = vmatpush1.msra.mxu0 0.0
    %241 = vmatprep.subr.mxu0 0.0
    %242 = vmatpush1.msra.mxu0 0.0
    %243 = vmatprep.subr.mxu0 0.0
    %244 = vmatpush1.msra.mxu0 0.0
    %245 = vmatprep.subr.mxu0 0.0
    %246 = vmatpush1.msra.mxu0 0.0
    %247 = vmatprep.subr.mxu0 0.0
    %248 = vmatpush1.msra.mxu0 0.0
    %249 = vmatprep.subr.mxu0 0.0
    %250 = vmatpush1.msra.mxu0 0.0
    %251 = vmatprep.subr.mxu0 0.0
    %252 = vmatpush1.msra.mxu0 0.0
    %253 = vmatprep.subr.mxu0 0.0
    %254 = vmatpush1.msra.mxu0 0.0
    %255 = vmatprep.subr.mxu0 0.0
    %256 = vmatpush1.msra.mxu0 0.0
    %257 = vmatprep.subr.mxu0 0.0
    %258 = vmatpush1.msra.mxu0 0.0
    %259 = vmatprep.subr.mxu0 0.0
    %260 = vmatpush1.msra.mxu0 0.0
    %261 = vmatprep.mubr.f32.mxu0 0.0
    %262 = vmatmul.mubr.f32.gmra.mrb[0].mxu0 %v195
    %v263 = vpop.f32.mrb[0].mxu0
    %v264 = vadd.f32 %v191, %v263
    %v265 = vpop.f32.mrb[0].mxu0
    %266 = vdwg.mxu0
    %v268 = vsel %vm193, %v99, 0
    %270 = vmatprep.subr.mxu0 0.0
    %271 = vmatpush1.msra.mxu0 %v183
    %272 = vmatprep.subr.mxu0 0.0
    %273 = vmatpush1.msra.mxu0 0.0
    %274 = vmatprep.subr.mxu0 0.0
    %275 = vmatpush1.msra.mxu0 0.0
    %276 = vmatprep.subr.mxu0 0.0
    %277 = vmatpush1.msra.mxu0 0.0
    %278 = vmatprep.subr.mxu0 0.0
    %279 = vmatpush1.msra.mxu0 0.0
    %280 = vmatprep.subr.mxu0 0.0
    %281 = vmatpush1.msra.mxu0 0.0
    %282 = vmatprep.subr.mxu0 0.0
    %283 = vmatpush1.msra.mxu0 0.0
    %284 = vmatprep.subr.mxu0 0.0
    %285 = vmatpush1.msra.mxu0 0.0
    %286 = vmatprep.subr.mxu0 0.0
    %287 = vmatpush1.msra.mxu0 0.0
    %288 = vmatprep.subr.mxu0 0.0
    %289 = vmatpush1.msra.mxu0 0.0
    %290 = vmatprep.subr.mxu0 0.0
    %291 = vmatpush1.msra.mxu0 0.0
    %292 = vmatprep.subr.mxu0 0.0
    %293 = vmatpush1.msra.mxu0 0.0
    %294 = vmatprep.subr.mxu0 0.0
    %295 = vmatpush1.msra.mxu0 0.0
    %296 = vmatprep.subr.mxu0 0.0
    %297 = vmatpush1.msra.mxu0 0.0
    %298 = vmatprep.subr.mxu0 0.0
    %299 = vmatpush1.msra.mxu0 0.0
    %300 = vmatprep.subr.mxu0 0.0
    %301 = vmatpush1.msra.mxu0 0.0
    %302 = vmatprep.subr.mxu0 0.0
    %303 = vmatpush1.msra.mxu0 0.0
    %304 = vmatprep.subr.mxu0 0.0
    %305 = vmatpush1.msra.mxu0 0.0
    %306 = vmatprep.subr.mxu0 0.0
    %307 = vmatpush1.msra.mxu0 0.0
    %308 = vmatprep.subr.mxu0 0.0
    %309 = vmatpush1.msra.mxu0 0.0
    %310 = vmatprep.subr.mxu0 0.0
    %311 = vmatpush1.msra.mxu0 0.0
    %312 = vmatprep.subr.mxu0 0.0
    %313 = vmatpush1.msra.mxu0 0.0
    %314 = vmatprep.subr.mxu0 0.0
    %315 = vmatpush1.msra.mxu0 0.0
    %316 = vmatprep.subr.mxu0 0.0
    %317 = vmatpush1.msra.mxu0 0.0
    %318 = vmatprep.subr.mxu0 0.0
    %319 = vmatpush1.msra.mxu0 0.0
    %320 = vmatprep.subr.mxu0 0.0
    %321 = vmatpush1.msra.mxu0 0.0
    %322 = vmatprep.subr.mxu0 0.0
    %323 = vmatpush1.msra.mxu0 0.0
    %324 = vmatprep.subr.mxu0 0.0
    %325 = vmatpush1.msra.mxu0 0.0
    %326 = vmatprep.subr.mxu0 0.0
    %327 = vmatpush1.msra.mxu0 0.0
    %328 = vmatprep.subr.mxu0 0.0
    %329 = vmatpush1.msra.mxu0 0.0
    %330 = vmatprep.subr.mxu0 0.0
    %331 = vmatpush1.msra.mxu0 0.0
    %332 = vmatprep.subr.mxu0 0.0
    %333 = vmatpush1.msra.mxu0 0.0
    %334 = vmatprep.mubr.f32.mxu0 0.0
    %335 = vmatmul.mubr.f32.gmra.mrb[0].mxu0 %v268
    %v336 = vpop.f32.mrb[0].mxu0
    %v337 = vadd.f32 %v191, %v336
    %v338 = vpop.f32.mrb[0].mxu0
    %339 = vdwg.mxu0
    %v340 = vmax.f32 %v264, 0.0
    %v341 = vmax.f32 %v337, 0.0
    %v342 = vrot.slane %v340, 4
    %v343 = vadd.f32 %v340, %v342
    %v344 = vrot.slane %v343, 2
    %v345 = vadd.f32 %v343, %v344
    %v346 = vrot.slane %v345, 1
    %v347 = vadd.f32 %v345, %v346
    %v348 = vrot.slane %v341, 4
    %v349 = vadd.f32 %v341, %v348
    %v350 = vrot.slane %v349, 2
    %v351 = vadd.f32 %v349, %v350
    %v352 = vrot.slane %v351, 1
    %v353 = vadd.f32 %v351, %v352
    %v354 = vrcp.pop 8.0
    %v355 = vmul.f32 %v347, %v354
    %v356 = vmul.f32 %v353, %v354
    %v357 = vld [vmem:[#allocation8] sm:$0xff]
    %v358 = vld [vmem:[#allocation8 + $0x8] sm:$0xff]
    %v359 = vld [vmem:[#allocation8 + $0x10] sm:$0xff]
    %v360 = vld [vmem:[#allocation8 + $0x18] sm:$0xff]
    %v361 = vld [vmem:[#allocation8 + $0x20] sm:$0xff]
    %v362 = vld [vmem:[#allocation8 + $0x28] sm:$0xff]
    %v363 = vld [vmem:[#allocation8 + $0x30] sm:$0xff]
    %v364 = vld [vmem:[#allocation8 + $0x38] sm:$0xff]
    %v365 = vld [vmem:[#allocation8 + $0x40] sm:$0xff]
    %v366 = vld [vmem:[#allocation8 + $0x48] sm:$0xff]
    %v367 = vld [vmem:[#allocation8 + $0x50] sm:$0xff]
    %v368 = vld [vmem:[#allocation8 + $0x58] sm:$0xff]
    %v369 = vld [vmem:[#allocation8 + $0x60] sm:$0xff]
    %v370 = vld [vmem:[#allocation8 + $0x68] sm:$0xff]
    %v371 = vld [vmem:[#allocation8 + $0x70] sm:$0xff]
    %v372 = vld [vmem:[#allocation8 + $0x78] sm:$0xff]
    %v373 = vld [vmem:[%s5] sm:$0x1]
    %v375 = vlaneseq
    %v376 = vshrl.u32 %v375, 7
    %v377 = vsub.s32 0, %v376
    %v378 = vrot.slane %v373, %v377
    %vm382 = vcmask 1041409
    %v383 = vsel %vm382, %v356, %v355
    %385 = vmatprep.subr.mxu0 0.0
    %386 = vmatpush1.msra.mxu0 %v357
    %387 = vmatprep.subr.mxu0 0.0
    %388 = vmatpush1.msra.mxu0 %v358
    %389 = vmatprep.subr.mxu0 0.0
    %390 = vmatpush1.msra.mxu0 %v359
    %391 = vmatprep.subr.mxu0 0.0
    %392 = vmatpush1.msra.mxu0 %v360
    %393 = vmatprep.subr.mxu0 0.0
    %394 = vmatpush1.msra.mxu0 %v361
    %395 = vmatprep.subr.mxu0 0.0
    %396 = vmatpush1.msra.mxu0 %v362
    %397 = vmatprep.subr.mxu0 0.0
    %398 = vmatpush1.msra.mxu0 %v363
    %399 = vmatprep.subr.mxu0 0.0
    %400 = vmatpush1.msra.mxu0 %v364
    %401 = vmatprep.subr.mxu0 0.0
    %402 = vmatpush1.msra.mxu0 %v365
    %403 = vmatprep.subr.mxu0 0.0
    %404 = vmatpush1.msra.mxu0 %v366
    %405 = vmatprep.subr.mxu0 0.0
    %406 = vmatpush1.msra.mxu0 %v367
    %407 = vmatprep.subr.mxu0 0.0
    %408 = vmatpush1.msra.mxu0 %v368
    %409 = vmatprep.subr.mxu0 0.0
    %410 = vmatpush1.msra.mxu0 %v369
    %411 = vmatprep.subr.mxu0 0.0
    %412 = vmatpush1.msra.mxu0 %v370
    %413 = vmatprep.subr.mxu0 0.0
    %414 = vmatpush1.msra.mxu0 %v371
    %415 = vmatprep.subr.mxu0 0.0
    %416 = vmatpush1.msra.mxu0 %v372
    %417 = vmatprep.subr.mxu0 0.0
    %418 = vmatpush1.msra.mxu0 0.0
    %419 = vmatprep.subr.mxu0 0.0
    %420 = vmatpush1.msra.mxu0 0.0
    %421 = vmatprep.subr.mxu0 0.0
    %422 = vmatpush1.msra.mxu0 0.0
    %423 = vmatprep.subr.mxu0 0.0
    %424 = vmatpush1.msra.mxu0 0.0
    %425 = vmatprep.subr.mxu0 0.0
    %426 = vmatpush1.msra.mxu0 0.0
    %427 = vmatprep.subr.mxu0 0.0
    %428 = vmatpush1.msra.mxu0 0.0
    %429 = vmatprep.subr.mxu0 0.0
    %430 = vmatpush1.msra.mxu0 0.0
    %431 = vmatprep.subr.mxu0 0.0
    %432 = vmatpush1.msra.mxu0 0.0
    %433 = vmatprep.subr.mxu0 0.0
    %434 = vmatpush1.msra.mxu0 0.0
    %435 = vmatprep.subr.mxu0 0.0
    %436 = vmatpush1.msra.mxu0 0.0
    %437 = vmatprep.subr.mxu0 0.0
    %438 = vmatpush1.msra.mxu0 0.0
    %439 = vmatprep.subr.mxu0 0.0
    %440 = vmatpush1.msra.mxu0 0.0
    %441 = vmatprep.subr.mxu0 0.0
    %442 = vmatpush1.msra.mxu0 0.0
    %443 = vmatprep.subr.mxu0 0.0
    %444 = vmatpush1.msra.mxu0 0.0
    %445 = vmatprep.subr.mxu0 0.0
    %446 = vmatpush1.msra.mxu0 0.0
    %447 = vmatprep.subr.mxu0 0.0
    %448 = vmatpush1.msra.mxu0 0.0
    %449 = vmatprep.mubr.f32.mxu0 0.0
    %450 = vmatmul.mubr.f32.gmra.mrb[0].mxu0 %v383
    %v451 = vpop.f32.mrb[0].mxu0
    %v452 = vadd.f32 %v378, %v451
    %v453 = vpop.f32.mrb[0].mxu0
    %454 = vdwg.mxu0
    %v455 = vmax.f32 %v452, 0.0
    %v456 = vld [vmem:[#allocation10] sm:$0xff]
    %v457 = vld [vmem:[#allocation10 + $0x8] sm:$0xff]
    %v458 = vld [vmem:[#allocation10 + $0x10] sm:$0xff]
    %v459 = vld [vmem:[#allocation10 + $0x18] sm:$0xff]
    %v460 = vld [vmem:[#allocation10 + $0x20] sm:$0xff]
    %v461 = vld [vmem:[#allocation10 + $0x28] sm:$0xff]
    %v462 = vld [vmem:[#allocation10 + $0x30] sm:$0xff]
    %v463 = vld [vmem:[#allocation10 + $0x38] sm:$0xff]
    %v464 = vld [vmem:[#allocation10 + $0x40] sm:$0xff]
    %v465 = vld [vmem:[#allocation10 + $0x48] sm:$0xff]
    %v466 = vld [vmem:[#allocation10 + $0x50] sm:$0xff]
    %v467 = vld [vmem:[#allocation10 + $0x58] sm:$0xff]
    %v468 = vld [vmem:[#allocation10 + $0x60] sm:$0xff]
    %v469 = vld [vmem:[#allocation10 + $0x68] sm:$0xff]
    %v470 = vld [vmem:[#allocation10 + $0x70] sm:$0xff]
    %v471 = vld [vmem:[#allocation10 + $0x78] sm:$0xff]
    %v472 = vld [vmem:[%s7] sm:$0x1]
    %v474 = vlaneseq
    %v475 = vshrl.u32 %v474, 7
    %v476 = vsub.s32 0, %v475
    %v477 = vrot.slane %v472, %v476
    %479 = vmatprep.subr.mxu0 0.0
    %480 = vmatpush1.msra.mxu0 %v456
    %481 = vmatprep.subr.mxu0 0.0
    %482 = vmatpush1.msra.mxu0 %v457
    %483 = vmatprep.subr.mxu0 0.0
    %484 = vmatpush1.msra.mxu0 %v458
    %485 = vmatprep.subr.mxu0 0.0
    %486 = vmatpush1.msra.mxu0 %v459
    %487 = vmatprep.subr.mxu0 0.0
    %488 = vmatpush1.msra.mxu0 %v460
    %489 = vmatprep.subr.mxu0 0.0
    %490 = vmatpush1.msra.mxu0 %v461
    %491 = vmatprep.subr.mxu0 0.0
    %492 = vmatpush1.msra.mxu0 %v462
    %493 = vmatprep.subr.mxu0 0.0
    %494 = vmatpush1.msra.mxu0 %v463
    %495 = vmatprep.subr.mxu0 0.0
    %496 = vmatpush1.msra.mxu0 %v464
    %497 = vmatprep.subr.mxu0 0.0
    %498 = vmatpush1.msra.mxu0 %v465
    %499 = vmatprep.subr.mxu0 0.0
    %500 = vmatpush1.msra.mxu0 %v466
    %501 = vmatprep.subr.mxu0 0.0
    %502 = vmatpush1.msra.mxu0 %v467
    %503 = vmatprep.subr.mxu0 0.0
    %504 = vmatpush1.msra.mxu0 %v468
    %505 = vmatprep.subr.mxu0 0.0
    %506 = vmatpush1.msra.mxu0 %v469
    %507 = vmatprep.subr.mxu0 0.0
    %508 = vmatpush1.msra.mxu0 %v470
    %509 = vmatprep.subr.mxu0 0.0
    %510 = vmatpush1.msra.mxu0 %v471
    %511 = vmatprep.subr.mxu0 0.0
    %512 = vmatpush1.msra.mxu0 0.0
    %513 = vmatprep.subr.mxu0 0.0
    %514 = vmatpush1.msra.mxu0 0.0
    %515 = vmatprep.subr.mxu0 0.0
    %516 = vmatpush1.msra.mxu0 0.0
    %517 = vmatprep.subr.mxu0 0.0
    %518 = vmatpush1.msra.mxu0 0.0
    %519 = vmatprep.subr.mxu0 0.0
    %520 = vmatpush1.msra.mxu0 0.0
    %521 = vmatprep.subr.mxu0 0.0
    %522 = vmatpush1.msra.mxu0 0.0
    %523 = vmatprep.subr.mxu0 0.0
    %524 = vmatpush1.msra.mxu0 0.0
    %525 = vmatprep.subr.mxu0 0.0
    %526 = vmatpush1.msra.mxu0 0.0
    %527 = vmatprep.subr.mxu0 0.0
    %528 = vmatpush1.msra.mxu0 0.0
    %529 = vmatprep.subr.mxu0 0.0
    %530 = vmatpush1.msra.mxu0 0.0
    %531 = vmatprep.subr.mxu0 0.0
    %532 = vmatpush1.msra.mxu0 0.0
    %533 = vmatprep.subr.mxu0 0.0
    %534 = vmatpush1.msra.mxu0 0.0
    %535 = vmatprep.subr.mxu0 0.0
    %536 = vmatpush1.msra.mxu0 0.0
    %537 = vmatprep.subr.mxu0 0.0
    %538 = vmatpush1.msra.mxu0 0.0
    %539 = vmatprep.subr.mxu0 0.0
    %540 = vmatpush1.msra.mxu0 0.0
    %541 = vmatprep.subr.mxu0 0.0
    %542 = vmatpush1.msra.mxu0 0.0
    %543 = vmatprep.mubr.f32.mxu0 0.0
    %544 = vmatmul.mubr.f32.gmra.mrb[0].mxu0 %v455
    %v545 = vpop.f32.mrb[0].mxu0
    %v546 = vadd.f32 %v477, %v545
    %v547 = vpop.f32.mrb[0].mxu0
    %548 = vdwg.mxu0
    %549 = vst [vmem:[#allocation11] sm:$0x3] %v546
    // Predicated region
    $region54: #{tpu_custom_call.1} parent=1 // pred_check
      _
    $region55: #{tpu_custom_call.1} parent=1 // pred_check_branch
      %551 = sbr.rel (0) target = $region57
    $region56: #{tpu_custom_call.1} parent=1 // pred_region
      %s553 = ssub.s32 32, 32
      %554 = vsyncadd [#allocation4], %s553
      %s556 = sshll.u32 [#allocation11], 4
      %s557 = int_to_ptr.vmem [resolvable:$true] %s556
      %559 = dma.vmem_to_hbm [thread:$0]  %s557, 32, %s8, [#allocation4]
    $region57: #{tpu_custom_call.1} parent=1 // pred_fallthru
      _
    // Predicated region
    $region58: #{tpu_custom_call.1} parent=1 // pred_check
      _
    $region59: #{tpu_custom_call.1} parent=1 // pred_check_branch
      %561 = sbr.rel (0) target = $region61
    $region60: #{tpu_custom_call.1} parent=1 // pred_region
      %562 = dma.done [#allocation4], 32
    $region61: #{tpu_custom_call.1} parent=1 // pred_fallthru
      _
    %563 = vsyncpa [#allocation3], 1
    %564 = vsyncpa [#allocation6], 1
    %565 = vsyncpa [#allocation9], 1
    %566 = vsyncpa [#allocation4], 1

</llo_original>
